<compile_context>
chip_gen: v6e
topology: v6e:2x2x1
jax: 0.10.0
libtpu: 0.0.40
codegen_flags: <defaults>
</compile_context>

<pallas_src>
from functools import partial

import jax
import jax.numpy as jnp
import numpy as np
from jax.experimental import pallas as pl
from jax.experimental.pallas import tpu as pltpu


def conv_bn_relu6_kernel(x_ref, w_ref, shift_ref, o_ref, *, stride):
    # x_ref:     (1, H+2, W+2, Cin)   padded NHWC input (bf16), one image
    # w_ref:     (9*Cin, Coutp)       BN-scale-folded weights (bf16), HWI-major K
    # shift_ref: (1, Coutp)           folded BN shift (f32)
    # o_ref:     (1, TH, Wo, Coutp)   output row-tile (f32), lane-dense channels
    _, Hp, Wp, Cin = x_ref.shape
    _, TH, Wo, Coutp = o_ref.shape

    h = pl.program_id(1)
    row0 = pl.multiple_of(h * (TH * stride), TH * stride)
    in_rows = (TH - 1) * stride + 3  # input rows needed for TH output rows

    # Load only the row slab this tile needs.
    slab = x_ref[0, pl.ds(row0, in_rows), :, :]            # (in_rows, Wp, Cin)

    # im2col: concatenate the 9 shifted taps along the channel axis so the
    # whole 3x3 conv is a single MXU matmul with K = 9*Cin.
    parts = []
    for kh in range(3):
        for kw in range(3):
            parts.append(
                slab[kh:kh + (TH - 1) * stride + 1:stride,
                     kw:kw + (Wo - 1) * stride + 1:stride, :])  # (TH, Wo, Cin)
    lhs = jnp.concatenate(parts, axis=-1).reshape(TH * Wo, 9 * Cin)

    acc = jnp.dot(lhs, w_ref[...], preferred_element_type=jnp.float32)

    # BatchNorm (eval, scale already folded into weights) + ReLU6, in f32.
    y = jnp.clip(acc + shift_ref[...], 0.0, 6.0)
    o_ref[0] = y.reshape(TH, Wo, Coutp).astype(o_ref.dtype)


def _row_tile(ho):
    for th in (8, 4, 2):
        if ho % th == 0:
            return th
    return 1


def conv_block(x_nchw, weight_oihw, gamma, beta, running_mean, running_var,
               stride=1, eps=1e-5):
    """Fused Conv2d(3x3, pad=1, no bias) + BatchNorm2d(eval) + ReLU6."""
    N, Cin, H, W = x_nchw.shape
    Cout = weight_oihw.shape[0]
    Ho = (H + 2 - 3) // stride + 1
    Wo = (W + 2 - 3) // stride + 1
    Coutp = ((Cout + 127) // 128) * 128  # lane-dense output channels

    # Eval-mode BN folded into per-channel scale/shift; scale goes into weights.
    scale = (gamma / jnp.sqrt(running_var + eps)).astype(jnp.float32)
    shift = (beta - running_mean * scale).astype(jnp.float32)

    # OIHW -> HWIO, fold BN scale, flatten taps into K, pad Cout, cast bf16.
    w = jnp.transpose(weight_oihw.astype(jnp.float32), (2, 3, 1, 0))  # (3,3,Cin,Cout)
    w = w * scale[None, None, None, :]
    w = w.reshape(9 * Cin, Cout)
    w = jnp.pad(w, ((0, 0), (0, Coutp - Cout))).astype(jnp.bfloat16)

    shift_p = jnp.pad(shift, (0, Coutp - Cout)).reshape(1, Coutp)

    # NCHW -> NHWC in bf16 + 1-pixel spatial zero pad (glue; hot path in-kernel).
    x = jnp.transpose(x_nchw.astype(jnp.bfloat16), (0, 2, 3, 1))
    x = jnp.pad(x, ((0, 0), (1, 1), (1, 1), (0, 0)))

    TH = _row_tile(Ho)

    # VMEM budget: double-buffered input + output blocks, weights, shift, slack.
    in_block = (H + 2) * (W + 2) * Cin * 2
    out_block = TH * Wo * Coutp * 4
    w_block = 9 * Cin * Coutp * 2 + Coutp * 4
    vmem_need = 2 * in_block + 2 * out_block + w_block + (8 << 20)
    vmem_limit = int(min(max(vmem_need, 32 << 20), 64 << 20))

    out_nhwc = pl.pallas_call(
        partial(conv_bn_relu6_kernel, stride=stride),
        out_shape=jax.ShapeDtypeStruct((N, Ho, Wo, Coutp), jnp.float32),
        grid=(N, Ho // TH),
        in_specs=[
            pl.BlockSpec((1, H + 2, W + 2, Cin), lambda n, h: (n, 0, 0, 0)),
            pl.BlockSpec((9 * Cin, Coutp), lambda n, h: (0, 0)),
            pl.BlockSpec((1, Coutp), lambda n, h: (0, 0)),
        ],
        out_specs=pl.BlockSpec((1, TH, Wo, Coutp), lambda n, h: (n, h, 0, 0)),
        compiler_params=pltpu.CompilerParams(
            dimension_semantics=("parallel", "parallel"),
            vmem_limit_bytes=vmem_limit),
    )(x, w, shift_p)

    # Drop channel padding, back to PyTorch's NCHW.
    return jnp.transpose(out_nhwc[..., :Cout], (0, 3, 1, 2))


def reference_conv_block(x_nchw, weight_oihw, gamma, beta, running_mean,
                         running_var, stride=1, eps=1e-5):
    y = jax.lax.conv_general_dilated(
        x_nchw.astype(jnp.float32), weight_oihw.astype(jnp.float32),
        window_strides=(stride, stride), padding=((1, 1), (1, 1)),
        dimension_numbers=("NCHW", "OIHW", "NCHW"))
    scale = gamma / jnp.sqrt(running_var + eps)
    shift = beta - running_mean * scale
    y = y * scale.reshape(1, -1, 1, 1) + shift.reshape(1, -1, 1, 1)
    return jnp.clip(y, 0.0, 6.0)


if __name__ == "__main__":
    # Small shapes consistent with the module: N=2, Cin=4, Cout=8, 16x16 spatial.
    N, Cin, Cout, H, W = 2, 4, 8, 16, 16
    stride = 1

    key = jax.random.PRNGKey(0)
    kx, kw, kg, kb, km, kv = jax.random.split(key, 6)

    x = jax.random.normal(kx, (N, Cin, H, W), jnp.float32)
    weight = jax.random.normal(kw, (Cout, Cin, 3, 3), jnp.float32) * 0.1
    gamma = jax.random.uniform(kg, (Cout,), jnp.float32, 0.5, 1.5)
    beta = jax.random.normal(kb, (Cout,), jnp.float32) * 0.1
    running_mean = jax.random.normal(km, (Cout,), jnp.float32) * 0.1
    running_var = jax.random.uniform(kv, (Cout,), jnp.float32, 0.5, 1.5)

    out = conv_block(x, weight, gamma, beta, running_mean, running_var,
                     stride=stride)
    out = jax.block_until_ready(out)

    ref = reference_conv_block(x, weight, gamma, beta, running_mean,
                               running_var, stride=stride)
    ref = jax.block_until_ready(ref)

    assert out.shape == (N, Cout, H, W), out.shape
    # bf16 matmul operands (f32 accumulation) -> compare at bf16-level tolerance.
    np.testing.assert_allclose(np.asarray(out), np.asarray(ref),
                               rtol=5e-2, atol=5e-2)
    print("KERNEL_OK")
</pallas_src>

<mosaic_0001>
module attributes {stable_mosaic.version = 11 : i64} {
  func.func @conv_bn_relu6_kernel(%arg0: i32, %arg1: i32, %arg2: memref<1x18x18x4xbf16, #tpu.memory_space<vmem>>, %arg3: memref<36x128xbf16, #tpu.memory_space<vmem>>, %arg4: memref<1x128xf32, #tpu.memory_space<vmem>>, %arg5: memref<1x8x16x128xf32, #tpu.memory_space<vmem>>) attributes {dimension_semantics = [#tpu.dimension_semantics<parallel>, #tpu.dimension_semantics<parallel>], iteration_bounds = array<i64: 2, 2>, scalar_prefetch = 0 : i64, scratch_operands = 0 : i64, tpu.core_type = #tpu.core_type<tc>, window_params = [{transform_indices = @transform_0, window_bounds = array<i64: 1, 18, 18, 4>}, {pipeline_mode = #tpu.pipeline_mode<synchronous>, transform_indices = @transform_1, window_bounds = array<i64: 36, 128>}, {pipeline_mode = #tpu.pipeline_mode<synchronous>, transform_indices = @transform_2, window_bounds = array<i64: 1, 128>}, {transform_indices = @transform_3, window_bounds = array<i64: 1, 8, 16, 128>}]} {
    %c8_i32 = arith.constant 8 : i32
    %0 = arith.muli %arg1, %c8_i32 : i32
    %1 = tpu.assume_multiple %0, 8 : i32
    %c0 = arith.constant 0 : index
    %2 = arith.index_cast %1 : i32 to index
    %c0_0 = arith.constant 0 : index
    %c0_1 = arith.constant 0 : index
    %3 = vector.load %arg2[%c0, %2, %c0_0, %c0_1] : memref<1x18x18x4xbf16, #tpu.memory_space<vmem>>, vector<1x10x18x4xbf16>
    %4 = vector.shape_cast %3 : vector<1x10x18x4xbf16> to vector<10x18x4xbf16>
    %5 = vector.extract_strided_slice %4 {offsets = [0, 0, 0], sizes = [8, 16, 4], strides = [1, 1, 1]} : vector<10x18x4xbf16> to vector<8x16x4xbf16>
    %6 = vector.extract_strided_slice %4 {offsets = [0, 1, 0], sizes = [8, 16, 4], strides = [1, 1, 1]} : vector<10x18x4xbf16> to vector<8x16x4xbf16>
    %7 = vector.extract_strided_slice %4 {offsets = [0, 2, 0], sizes = [8, 16, 4], strides = [1, 1, 1]} : vector<10x18x4xbf16> to vector<8x16x4xbf16>
    %8 = vector.extract_strided_slice %4 {offsets = [1, 0, 0], sizes = [8, 16, 4], strides = [1, 1, 1]} : vector<10x18x4xbf16> to vector<8x16x4xbf16>
    %9 = vector.extract_strided_slice %4 {offsets = [1, 1, 0], sizes = [8, 16, 4], strides = [1, 1, 1]} : vector<10x18x4xbf16> to vector<8x16x4xbf16>
    %10 = vector.extract_strided_slice %4 {offsets = [1, 2, 0], sizes = [8, 16, 4], strides = [1, 1, 1]} : vector<10x18x4xbf16> to vector<8x16x4xbf16>
    %11 = vector.extract_strided_slice %4 {offsets = [2, 0, 0], sizes = [8, 16, 4], strides = [1, 1, 1]} : vector<10x18x4xbf16> to vector<8x16x4xbf16>
    %12 = vector.extract_strided_slice %4 {offsets = [2, 1, 0], sizes = [8, 16, 4], strides = [1, 1, 1]} : vector<10x18x4xbf16> to vector<8x16x4xbf16>
    %13 = vector.extract_strided_slice %4 {offsets = [2, 2, 0], sizes = [8, 16, 4], strides = [1, 1, 1]} : vector<10x18x4xbf16> to vector<8x16x4xbf16>
    %14 = tpu.concatenate %5, %6, %7, %8, %9, %10, %11, %12, %13 in 2 : vector<8x16x4xbf16>, vector<8x16x4xbf16>, vector<8x16x4xbf16>, vector<8x16x4xbf16>, vector<8x16x4xbf16>, vector<8x16x4xbf16>, vector<8x16x4xbf16>, vector<8x16x4xbf16>, vector<8x16x4xbf16> -> vector<8x16x36xbf16>
    %15 = vector.shape_cast %14 : vector<8x16x36xbf16> to vector<128x36xbf16>
    %c0_2 = arith.constant 0 : index
    %c0_3 = arith.constant 0 : index
    %16 = vector.load %arg3[%c0_2, %c0_3] : memref<36x128xbf16, #tpu.memory_space<vmem>>, vector<36x128xbf16>
    %cst = arith.constant dense<0.000000e+00> : vector<128x128xf32>
    %17 = tpu.matmul %15, %16, %cst {dimension_numbers = #tpu.dot_dimension_numbers<[1], [0], [0], [1], [0, 0, 1, 1], [], []>} : vector<128x36xbf16>, vector<36x128xbf16>, vector<128x128xf32> -> vector<128x128xf32>
    %c0_4 = arith.constant 0 : index
    %c0_5 = arith.constant 0 : index
    %18 = vector.load %arg4[%c0_4, %c0_5] : memref<1x128xf32, #tpu.memory_space<vmem>>, vector<1x128xf32>
    %19 = vector.broadcast %18 : vector<1x128xf32> to vector<128x128xf32>
    %20 = arith.addf %17, %19 : vector<128x128xf32>
    %cst_6 = arith.constant 0.000000e+00 : f32
    %cst_7 = arith.constant 6.000000e+00 : f32
    %21 = vector.broadcast %cst_6 : f32 to vector<128x128xf32>
    %22 = arith.maximumf %21, %20 : vector<128x128xf32>
    %23 = vector.broadcast %cst_7 : f32 to vector<128x128xf32>
    %24 = arith.minimumf %23, %22 : vector<128x128xf32>
    %25 = vector.shape_cast %24 : vector<128x128xf32> to vector<8x16x128xf32>
    %c0_8 = arith.constant 0 : index
    %c0_9 = arith.constant 0 : index
    %c0_10 = arith.constant 0 : index
    %c0_11 = arith.constant 0 : index
    %26 = vector.load %arg5[%c0_8, %c0_9, %c0_10, %c0_11] : memref<1x8x16x128xf32, #tpu.memory_space<vmem>>, vector<1x8x16x128xf32>
    %27 = vector.shape_cast %26 : vector<1x8x16x128xf32> to vector<8x16x128xf32>
    %28 = vector.shape_cast %25 : vector<8x16x128xf32> to vector<1x8x16x128xf32>
    tpu.vector_store %arg5[%c0_8, %c0_9, %c0_10, %c0_11], %28 {strides = array<i32>} : memref<1x8x16x128xf32, #tpu.memory_space<vmem>>, vector<1x8x16x128xf32>,
    return
  }
  func.func @transform_0(%arg0: i32, %arg1: i32) -> (i32, i32, i32, i32) {
    %c0_i32 = arith.constant 0 : i32
    %c0_i32_0 = arith.constant 0 : i32
    %c0_i32_1 = arith.constant 0 : i32
    %c0_i32_2 = arith.constant 0 : i32
    return %arg0, %c0_i32, %c0_i32_0, %c0_i32_1 : i32, i32, i32, i32
  }
  func.func @transform_1(%arg0: i32, %arg1: i32) -> (i32, i32) {
    %c0_i32 = arith.constant 0 : i32
    %c0_i32_0 = arith.constant 0 : i32
    %c0_i32_1 = arith.constant 0 : i32
    return %c0_i32, %c0_i32_0 : i32, i32
  }
  func.func @transform_2(%arg0: i32, %arg1: i32) -> (i32, i32) {
    %c0_i32 = arith.constant 0 : i32
    %c0_i32_0 = arith.constant 0 : i32
    %c0_i32_1 = arith.constant 0 : i32
    return %c0_i32, %c0_i32_0 : i32, i32
  }
  func.func @transform_3(%arg0: i32, %arg1: i32) -> (i32, i32, i32, i32) {
    %c0_i32 = arith.constant 0 : i32
    %c0_i32_0 = arith.constant 0 : i32
    %c0_i32_1 = arith.constant 0 : i32
    return %arg0, %arg1, %c0_i32, %c0_i32_0 : i32, i32, i32, i32
  }
}

</mosaic_0001>

<llo_original>
// kernel: tpu_custom_call.1
$region0: #{tpu_custom_call.1}
  #allocation0 [shape = 'u32[]', space=smem, size = 0x4, offset = 0x4, fixed_abs, tag = 'smem constant byte address 0x4 - core index']
  #allocation1 [shape = 'u32[144,128]{1,0:T(1,128)}', space=vmem, size = 0x12000, scoped, tag = 'internal scratch']
  %s0 = inlined_call_operand.vmem [shape: bf16[2,18,18,4], index: 0, kind: input, shape index: {}]
  %s1 = inlined_call_operand.vmem [shape: bf16[36,128], index: 1, kind: input, shape index: {}]
  %s2 = inlined_call_operand.vmem [shape: f32[1,128], index: 2, kind: input, shape index: {}]
  %s3 = inlined_call_operand.hbm [shape: f32[2,16,16,128], index: 3, kind: output, shape index: {}]
  %s4 = sld [smem:[#allocation0]]
  $region45: #{tpu_custom_call.1} parent=0
    _
  %s6 = ssub.s32 1, %s4
  %s7 = scalar_select 0, %s6, %s4
  $region1: #{tpu_custom_call.1} parent=0
    #allocation2 [shape = 'u8[131072]{0}', space=vmem, size = 0x20000, scoped, tag = 'output window, operand 0']
    #allocation3 [shape = 's32[2]{0}', space=sflag, size = 0x8, scoped, tag = 'scoped memory for tpu_custom_call.1']
    %8 = vsyncpa [#allocation3], 0
    %s9 = scalar_lea.sflag [#allocation3], 1
    %10 = vsyncpa %s9, 0
    loop: start=0, step=1, limit=6
    $region2: #{tpu_custom_call.1} parent=1 // loop_pre_header
      _
    $region3: #{tpu_custom_call.1} parent=1 // loop_header
      %s12 = sphi 0, %s16
      %p13 = scmp.ge.s32.totalorder %s12, 6
      %s19 = sphi 0, %s31
      %s20 = sphi 0, %s27
      %s21 = sphi 0, %s19
      %s22 = sphi 0, %s20
      %s23 = sphi 0, %s21
      %s24 = sphi 0, %s22
      %s34 = sphi 0, %s36
      %s37 = sphi 0, %s34
      %s38 = sphi 0, %s37
      %s54 = sphi 0, %s38
      %s58 = sphi 0, %s58
      %s60 = sphi 0, %s58
      %s61 = sphi 0, %s60
      %s75 = sphi 0, %s61
      %s79 = sphi 0, %s79
      %s81 = sphi 0, %s79
      %s82 = sphi 0, %s81
      %s96 = sphi 0, %s82
      %s104 = sphi 0, %s106
      %s107 = sphi 0, %s104
      %s108 = sphi 0, %s107
      %s124 = sphi 0, %s108
    $region4: #{tpu_custom_call.1} parent=1 // loop_header_branch
      %15 = sbr.rel (%p13) target = $region8
    $region5: #{tpu_custom_call.1} parent=1 // loop_body
      %s17 = ssub.s32 %s12, 1
      %s18 = ssub.s32 %s12, 2
      %s25 = sadd.s32 1, %s20
      %p26 = scmp.ge.s32.totalorder %s25, 2
      %s27 = scalar_select %p26, 0, %s25
      %s28 = sadd.s32 1, %s19
      %s29 = scalar_select %p26, %s28, %s19
      %p30 = scmp.ge.s32.totalorder %s29, 2
      %s31 = scalar_select %p30, 0, %s29
      %s32 = ssub.s32 %s19, %s31
      %p33 = scmp.eq.s32.totalorder %s32, 0
      %s35 = sadd.s32 %s34, 1
      %s36 = scalar_select %p33, %s34, %s35
      %p39 = pneg %p33
      %p40 = scmp.eq.s32.totalorder %s12, 3
      %p41 = por %p39, %p40
      %p42 = scmp.ne.s32.totalorder %s34, %s37
      %p43 = scmp.eq.s32.totalorder %s12, 0
      %p44 = por %p42, %p43
      %p45 = scmp.ne.s32.totalorder %s34, %s37
      %p46 = scmp.eq.s32.totalorder %s17, 3
      %p47 = por %p45, %p46
      %p48 = scmp.ne.s32.totalorder %s37, %s38
      %p49 = scmp.eq.s32.totalorder %s17, 0
      %p50 = por %p48, %p49
      %p51 = scmp.ne.s32.totalorder %s37, %s38
      %p52 = scmp.eq.s32.totalorder %s18, 3
      %p53 = por %p51, %p52
      %p55 = scmp.ne.s32.totalorder %s38, %s54
      %p56 = scmp.eq.s32.totalorder %s18, 0
      %p57 = por %p55, %p56
      %s59 = sadd.s32 %s58, 1
      %p62 = scmp.eq.s32.totalorder %s12, 3
      %p63 = scmp.ne.s32.totalorder %s58, %s60
      %p64 = scmp.eq.s32.totalorder %s12, 0
      %p65 = por %p63, %p64
      %p66 = scmp.ne.s32.totalorder %s58, %s60
      %p67 = scmp.eq.s32.totalorder %s17, 3
      %p68 = por %p66, %p67
      %p69 = scmp.ne.s32.totalorder %s60, %s61
      %p70 = scmp.eq.s32.totalorder %s17, 0
      %p71 = por %p69, %p70
      %p72 = scmp.ne.s32.totalorder %s60, %s61
      %p73 = scmp.eq.s32.totalorder %s18, 3
      %p74 = por %p72, %p73
      %p76 = scmp.ne.s32.totalorder %s61, %s75
      %p77 = scmp.eq.s32.totalorder %s18, 0
      %p78 = por %p76, %p77
      %s80 = sadd.s32 %s79, 1
      %p83 = scmp.eq.s32.totalorder %s12, 3
      %p84 = scmp.ne.s32.totalorder %s79, %s81
      %p85 = scmp.eq.s32.totalorder %s12, 0
      %p86 = por %p84, %p85
      %p87 = scmp.ne.s32.totalorder %s79, %s81
      %p88 = scmp.eq.s32.totalorder %s17, 3
      %p89 = por %p87, %p88
      %p90 = scmp.ne.s32.totalorder %s81, %s82
      %p91 = scmp.eq.s32.totalorder %s17, 0
      %p92 = por %p90, %p91
      %p93 = scmp.ne.s32.totalorder %s81, %s82
      %p94 = scmp.eq.s32.totalorder %s18, 3
      %p95 = por %p93, %p94
      %p97 = scmp.ne.s32.totalorder %s82, %s96
      %p98 = scmp.eq.s32.totalorder %s18, 0
      %p99 = por %p97, %p98
      %s100 = ssub.s32 %s19, %s31
      %s101 = ssub.s32 %s20, %s27
      %s102 = sor.u32 %s100, %s101
      %p103 = scmp.eq.s32.totalorder %s102, 0
      %s105 = sadd.s32 %s104, 1
      %s106 = scalar_select %p103, %s104, %s105
      %p109 = pneg %p103
      %p110 = scmp.eq.s32.totalorder %s12, 3
      %p111 = por %p109, %p110
      %p112 = scmp.ne.s32.totalorder %s104, %s107
      %p113 = scmp.eq.s32.totalorder %s12, 0
      %p114 = por %p112, %p113
      %p115 = scmp.ne.s32.totalorder %s104, %s107
      %p116 = scmp.eq.s32.totalorder %s17, 3
      %p117 = por %p115, %p116
      %p118 = scmp.ne.s32.totalorder %s107, %s108
      %p119 = scmp.eq.s32.totalorder %s17, 0
      %p120 = por %p118, %p119
      %p121 = scmp.ne.s32.totalorder %s107, %s108
      %p122 = scmp.eq.s32.totalorder %s18, 3
      %p123 = por %p121, %p122
      %p125 = scmp.ne.s32.totalorder %s108, %s124
      %p126 = scmp.eq.s32.totalorder %s18, 0
      %p127 = por %p125, %p126
      %p128 = scmp.le.s32.totalorder 1, %s12
      %p129 = scmp.lt.s32.totalorder %s12, 5
      %p130 = pnand %p128, %p129
      %p131 = pneg %p130
      // Predicated region
      $region9: #{tpu_custom_call.1} parent=5 // pred_check
        _
      $region10: #{tpu_custom_call.1} parent=5 // pred_check_branch
        %133 = sbr.rel (%p130) target = $region12
      $region11: #{tpu_custom_call.1} parent=5 // pred_region
        %s134 = ssub.s32 %s12, 1
        // Predicated region
        $region13: #{tpu_custom_call.1} parent=11 // pred_check
          %p135 = pneg %p71
        $region14: #{tpu_custom_call.1} parent=11 // pred_check_branch
          %137 = sbr.rel (%p135) target = $region16
        $region15: #{tpu_custom_call.1} parent=11 // pred_region
          _
        $region16: #{tpu_custom_call.1} parent=11 // pred_fallthru
          _
        // Predicated region
        $region17: #{tpu_custom_call.1} parent=11 // pred_check
          %p138 = pneg %p92
        $region18: #{tpu_custom_call.1} parent=11 // pred_check_branch
          %140 = sbr.rel (%p138) target = $region20
        $region19: #{tpu_custom_call.1} parent=11 // pred_region
          _
        $region20: #{tpu_custom_call.1} parent=11 // pred_fallthru
          _
      $region12: #{tpu_custom_call.1} parent=5 // pred_fallthru
        _
      %p141 = scmp.lt.s32.totalorder %s12, 4
      // Predicated region
      $region21: #{tpu_custom_call.1} parent=5 // pred_check
        %p142 = pneg %p141
      $region22: #{tpu_custom_call.1} parent=5 // pred_check_branch
        %144 = sbr.rel (%p142) target = $region24
      $region23: #{tpu_custom_call.1} parent=5 // pred_region
        // Predicated region
        $region25: #{tpu_custom_call.1} parent=23 // pred_check
          %p145 = pneg %p44
        $region26: #{tpu_custom_call.1} parent=23 // pred_check_branch
          %147 = sbr.rel (%p145) target = $region28
        $region27: #{tpu_custom_call.1} parent=23 // pred_region
          %p148 = scmp.lt.s32.totalorder %s19, 1
          %s149 = scalar_select %p148, %s19, 1
          %s150 = smul.addr %s149, 54
          %s151 = smul.addr %s150, 4
          %s152 = scalar_lea.vmem %s0, %s151
        $region28: #{tpu_custom_call.1} parent=23 // pred_fallthru
          _
      $region24: #{tpu_custom_call.1} parent=5 // pred_fallthru
        _
      %p153 = scmp.le.s32.totalorder 1, %s12
      %p154 = scmp.lt.s32.totalorder %s12, 5
      %p155 = pnand %p153, %p154
      %p156 = pneg %p155
      // Predicated region
      $region29: #{tpu_custom_call.1} parent=5 // pred_check
        _
      $region30: #{tpu_custom_call.1} parent=5 // pred_check_branch
        %158 = sbr.rel (%p155) target = $region32
      $region31: #{tpu_custom_call.1} parent=5 // pred_region
        %s159 = ssub.s32 %s12, 1
        %p160 = scmp.lt.s32.totalorder %s21, 1
        %s161 = scalar_select %p160, %s21, 1
        %s162 = smul.addr %s161, 54
        %s163 = smul.addr %s162, 4
        %s164 = scalar_lea.vmem %s0, %s163
        %p165 = pneg %p50
        %p166 = pneg %p47
        %p167 = pneg %p71
        %p168 = pneg %p68
        %p169 = pneg %p92
        %p170 = pneg %p89
        %p171 = pneg %p120
        %p172 = pneg %p117
        %s173 = sand.u32 %s107, 1
        %s174 = scalar_lea.sflag [#allocation3], %s173
        %s175 = sand.u32 %s107, 1
        %s176 = smul.addr %s175, 128
        %s177 = scalar_lea.vmem [#allocation2], %s176
        %p178 = scmp.lt.s32.totalorder %s21, 1
        %s179 = scalar_select %p178, %s21, 1
        %s180 = smul.addr %s179, 54
        %s181 = smul.addr %s180, 4
        %s182 = scalar_lea.vmem %s0, %s181
        %s183 = smul.u32 8, %s22
        %s185 = smul.u32 %s22, 8
        %s186 = smul.u32 %s185, 3
        %s187 = smul.addr %s186, 4
        %s188 = scalar_lea.vmem %s182, %s187
        %v189 = vld [vmem:[%s188] sm:$0xf]
        %v190 = vld [vmem:[%s188 + $0x4] sm:$0xf]
        %v191 = vld [vmem:[%s188 + $0x8] sm:$0x1]
        %v192 = vld [vmem:[%s188 + $0xc] sm:$0xf]
        %v193 = vld [vmem:[%s188 + $0x10] sm:$0xf]
        %v194 = vld [vmem:[%s188 + $0x14] sm:$0x1]
        %v195 = vld [vmem:[%s188 + $0x18] sm:$0xf]
        %v196 = vld [vmem:[%s188 + $0x1c] sm:$0xf]
        %v197 = vld [vmem:[%s188 + $0x20] sm:$0x1]
        %v198 = vld [vmem:[%s188 + $0x24] sm:$0xf]
        %v199 = vld [vmem:[%s188 + $0x28] sm:$0xf]
        %v200 = vld [vmem:[%s188 + $0x2c] sm:$0x1]
        %v201 = vld [vmem:[%s188 + $0x30] sm:$0xf]
        %v202 = vld [vmem:[%s188 + $0x34] sm:$0xf]
        %v203 = vld [vmem:[%s188 + $0x38] sm:$0x1]
        %v204 = vld [vmem:[%s188 + $0x3c] sm:$0xf]
        %v205 = vld [vmem:[%s188 + $0x40] sm:$0xf]
        %v206 = vld [vmem:[%s188 + $0x44] sm:$0x1]
        %v207 = vld [vmem:[%s188 + $0x48] sm:$0xf]
        %v208 = vld [vmem:[%s188 + $0x4c] sm:$0xf]
        %v209 = vld [vmem:[%s188 + $0x50] sm:$0x1]
        %v210 = vld [vmem:[%s188 + $0x54] sm:$0xf]
        %v211 = vld [vmem:[%s188 + $0x58] sm:$0xf]
        %v212 = vld [vmem:[%s188 + $0x5c] sm:$0x1]
        %v213 = vld [vmem:[%s188 + $0x60] sm:$0xf]
        %v214 = vld [vmem:[%s188 + $0x64] sm:$0xf]
        %v215 = vld [vmem:[%s188 + $0x68] sm:$0x1]
        %v216 = vld [vmem:[%s188 + $0x6c] sm:$0xf]
        %v217 = vld [vmem:[%s188 + $0x70] sm:$0xf]
        %v218 = vld [vmem:[%s188 + $0x74] sm:$0x1]
        %v235 = vunpack.c.l.b16 %v189
        %v236 = vunpack.c.l.b16 %v190
        %v237 = vunpack.c.l.b16 %v192
        %v238 = vunpack.c.l.b16 %v193
        %v239 = vunpack.c.l.b16 %v195
        %v240 = vunpack.c.l.b16 %v196
        %v241 = vunpack.c.l.b16 %v198
        %v242 = vunpack.c.l.b16 %v199
        %v243 = vunpack.c.l.b16 %v201
        %v244 = vunpack.c.l.b16 %v202
        %v245 = vunpack.c.l.b16 %v204
        %v246 = vunpack.c.l.b16 %v205
        %v247 = vunpack.c.l.b16 %v207
        %v248 = vunpack.c.l.b16 %v208
        %v249 = vunpack.c.l.b16 %v210
        %v250 = vunpack.c.l.b16 %v211
        %v251 = vpack.c.b16 %v236, %v235
        %v252 = vpack.c.b16 %v238, %v237
        %v253 = vpack.c.b16 %v240, %v239
        %v254 = vpack.c.b16 %v242, %v241
        %v255 = vpack.c.b16 %v244, %v243
        %v256 = vpack.c.b16 %v246, %v245
        %v257 = vpack.c.b16 %v248, %v247
        %v258 = vpack.c.b16 %v250, %v249
        %v267 = vunpack.c.l.b16 %v191
        %v268 = vunpack.c.l.b16 %v194
        %v269 = vunpack.c.l.b16 %v197
        %v270 = vunpack.c.l.b16 %v200
        %v271 = vunpack.c.l.b16 %v203
        %v272 = vunpack.c.l.b16 %v206
        %v273 = vunpack.c.l.b16 %v209
        %v274 = vunpack.c.l.b16 %v212
        %v275 = vpack.c.b16 %v267, %v267
        %v276 = vpack.c.b16 %v268, %v268
        %v277 = vpack.c.b16 %v269, %v269
        %v278 = vpack.c.b16 %v270, %v270
        %v279 = vpack.c.b16 %v271, %v271
        %v280 = vpack.c.b16 %v272, %v272
        %v281 = vpack.c.b16 %v273, %v273
        %v282 = vpack.c.b16 %v274, %v274
        %vm283 = vsmask.f32 7424
        %v285 = vshrl.u32 %v251, 16
        %v287 = vshll.u32 %v251, 16
        %v289 = vrot.slane %v287, 1
        %v290 = vor.u32 %v285, %v289
        %v292 = vshll.u32 %v275, 16
        %v294 = vrot.slane %v292, 1
        %v295 = vsel %vm283, %v290, %v294
        %v297 = vshrl.u32 %v252, 16
        %v299 = vshll.u32 %v252, 16
        %v301 = vrot.slane %v299, 1
        %v302 = vor.u32 %v297, %v301
        %v304 = vshll.u32 %v276, 16
        %v306 = vrot.slane %v304, 1
        %v307 = vsel %vm283, %v302, %v306
        %v309 = vshrl.u32 %v253, 16
        %v311 = vshll.u32 %v253, 16
        %v313 = vrot.slane %v311, 1
        %v314 = vor.u32 %v309, %v313
        %v316 = vshll.u32 %v277, 16
        %v318 = vrot.slane %v316, 1
        %v319 = vsel %vm283, %v314, %v318
        %v321 = vshrl.u32 %v254, 16
        %v323 = vshll.u32 %v254, 16
        %v325 = vrot.slane %v323, 1
        %v326 = vor.u32 %v321, %v325
        %v328 = vshll.u32 %v278, 16
        %v330 = vrot.slane %v328, 1
        %v331 = vsel %vm283, %v326, %v330
        %v333 = vshrl.u32 %v255, 16
        %v335 = vshll.u32 %v255, 16
        %v337 = vrot.slane %v335, 1
        %v338 = vor.u32 %v333, %v337
        %v340 = vshll.u32 %v279, 16
        %v342 = vrot.slane %v340, 1
        %v343 = vsel %vm283, %v338, %v342
        %v345 = vshrl.u32 %v256, 16
        %v347 = vshll.u32 %v256, 16
        %v349 = vrot.slane %v347, 1
        %v350 = vor.u32 %v345, %v349
        %v352 = vshll.u32 %v280, 16
        %v354 = vrot.slane %v352, 1
        %v355 = vsel %vm283, %v350, %v354
        %v357 = vshrl.u32 %v257, 16
        %v359 = vshll.u32 %v257, 16
        %v361 = vrot.slane %v359, 1
        %v362 = vor.u32 %v357, %v361
        %v364 = vshll.u32 %v281, 16
        %v366 = vrot.slane %v364, 1
        %v367 = vsel %vm283, %v362, %v366
        %v369 = vshrl.u32 %v258, 16
        %v371 = vshll.u32 %v258, 16
        %v373 = vrot.slane %v371, 1
        %v374 = vor.u32 %v369, %v373
        %v376 = vshll.u32 %v282, 16
        %v378 = vrot.slane %v376, 1
        %v379 = vsel %vm283, %v374, %v378
        %380 = vrot.lane.b32.xlu0 %v295, 4
        %v381 = vpop.permute.xlu0 %380
        %382 = vrot.lane.b32.xlu0 %v307, 4
        %v383 = vpop.permute.xlu0 %382
        %384 = vrot.lane.b32.xlu0 %v319, 4
        %v385 = vpop.permute.xlu0 %384
        %386 = vrot.lane.b32.xlu0 %v331, 4
        %v387 = vpop.permute.xlu0 %386
        %388 = vrot.lane.b32.xlu0 %v343, 4
        %v389 = vpop.permute.xlu0 %388
        %390 = vrot.lane.b32.xlu0 %v355, 4
        %v391 = vpop.permute.xlu0 %390
        %392 = vrot.lane.b32.xlu0 %v367, 4
        %v393 = vpop.permute.xlu0 %392
        %394 = vrot.lane.b32.xlu0 %v379, 4
        %v395 = vpop.permute.xlu0 %394
        %vm396 = vcmask 1046528
        %v397 = vrot.slane %v251, 1
        %v398 = vrot.slane %v275, 1
        %v399 = vsel %vm396, %v397, %v398
        %v400 = vrot.slane %v252, 1
        %v401 = vrot.slane %v276, 1
        %v402 = vsel %vm396, %v400, %v401
        %v403 = vrot.slane %v253, 1
        %v404 = vrot.slane %v277, 1
        %v405 = vsel %vm396, %v403, %v404
        %v406 = vrot.slane %v254, 1
        %v407 = vrot.slane %v278, 1
        %v408 = vsel %vm396, %v406, %v407
        %v409 = vrot.slane %v255, 1
        %v410 = vrot.slane %v279, 1
        %v411 = vsel %vm396, %v409, %v410
        %v412 = vrot.slane %v256, 1
        %v413 = vrot.slane %v280, 1
        %v414 = vsel %vm396, %v412, %v413
        %v415 = vrot.slane %v257, 1
        %v416 = vrot.slane %v281, 1
        %v417 = vsel %vm396, %v415, %v416
        %v418 = vrot.slane %v258, 1
        %v419 = vrot.slane %v282, 1
        %v420 = vsel %vm396, %v418, %v419
        %421 = vrot.lane.b32.xlu0 %v399, 8
        %v422 = vpop.permute.xlu0 %421
        %423 = vrot.lane.b32.xlu0 %v402, 8
        %v424 = vpop.permute.xlu0 %423
        %425 = vrot.lane.b32.xlu0 %v405, 8
        %v426 = vpop.permute.xlu0 %425
        %427 = vrot.lane.b32.xlu0 %v408, 8
        %v428 = vpop.permute.xlu0 %427
        %429 = vrot.lane.b32.xlu0 %v411, 8
        %v430 = vpop.permute.xlu0 %429
        %431 = vrot.lane.b32.xlu0 %v414, 8
        %v432 = vpop.permute.xlu0 %431
        %433 = vrot.lane.b32.xlu0 %v417, 8
        %v434 = vpop.permute.xlu0 %433
        %435 = vrot.lane.b32.xlu0 %v420, 8
        %v436 = vpop.permute.xlu0 %435
        %v439 = vunpack.c.l.b16 %v213
        %v440 = vunpack.c.l.b16 %v214
        %v441 = vpack.c.b16 %v440, %v439
        %442 = vrot.lane.b32.xlu0 %v252, 12
        %v443 = vpop.permute.xlu0 %442
        %444 = vrot.lane.b32.xlu0 %v253, 12
        %v445 = vpop.permute.xlu0 %444
        %446 = vrot.lane.b32.xlu0 %v254, 12
        %v447 = vpop.permute.xlu0 %446
        %448 = vrot.lane.b32.xlu0 %v255, 12
        %v449 = vpop.permute.xlu0 %448
        %450 = vrot.lane.b32.xlu0 %v256, 12
        %v451 = vpop.permute.xlu0 %450
        %452 = vrot.lane.b32.xlu0 %v257, 12
        %v453 = vpop.permute.xlu0 %452
        %454 = vrot.lane.b32.xlu0 %v258, 12
        %v455 = vpop.permute.xlu0 %454
        %456 = vrot.lane.b32.xlu0 %v441, 12
        %v457 = vpop.permute.xlu0 %456
        %v459 = vunpack.c.l.b16 %v215
        %v460 = vpack.c.b16 %v459, %v459
        %v462 = vshrl.u32 %v441, 16
        %v464 = vshll.u32 %v441, 16
        %v466 = vrot.slane %v464, 1
        %v467 = vor.u32 %v462, %v466
        %v469 = vshll.u32 %v460, 16
        %v471 = vrot.slane %v469, 1
        %v472 = vsel %vm283, %v467, %v471
        %473 = vrot.lane.b32.xlu0 %v307, 16
        %v474 = vpop.permute.xlu0 %473
        %475 = vrot.lane.b32.xlu0 %v319, 16
        %v476 = vpop.permute.xlu0 %475
        %477 = vrot.lane.b32.xlu0 %v331, 16
        %v478 = vpop.permute.xlu0 %477
        %479 = vrot.lane.b32.xlu0 %v343, 16
        %v480 = vpop.permute.xlu0 %479
        %481 = vrot.lane.b32.xlu0 %v355, 16
        %v482 = vpop.permute.xlu0 %481
        %483 = vrot.lane.b32.xlu0 %v367, 16
        %v484 = vpop.permute.xlu0 %483
        %485 = vrot.lane.b32.xlu0 %v379, 16
        %v486 = vpop.permute.xlu0 %485
        %487 = vrot.lane.b32.xlu0 %v472, 16
        %v488 = vpop.permute.xlu0 %487
        %v489 = vrot.slane %v441, 1
        %v490 = vrot.slane %v460, 1
        %v491 = vsel %vm396, %v489, %v490
        %492 = vrot.lane.b32.xlu0 %v402, 20
        %v493 = vpop.permute.xlu0 %492
        %494 = vrot.lane.b32.xlu0 %v405, 20
        %v495 = vpop.permute.xlu0 %494
        %496 = vrot.lane.b32.xlu0 %v408, 20
        %v497 = vpop.permute.xlu0 %496
        %498 = vrot.lane.b32.xlu0 %v411, 20
        %v499 = vpop.permute.xlu0 %498
        %500 = vrot.lane.b32.xlu0 %v414, 20
        %v501 = vpop.permute.xlu0 %500
        %502 = vrot.lane.b32.xlu0 %v417, 20
        %v503 = vpop.permute.xlu0 %502
        %504 = vrot.lane.b32.xlu0 %v420, 20
        %v505 = vpop.permute.xlu0 %504
        %506 = vrot.lane.b32.xlu0 %v491, 20
        %v507 = vpop.permute.xlu0 %506
        %v510 = vunpack.c.l.b16 %v216
        %v511 = vunpack.c.l.b16 %v217
        %v512 = vpack.c.b16 %v511, %v510
        %513 = vrot.lane.b32.xlu0 %v253, 24
        %v514 = vpop.permute.xlu0 %513
        %515 = vrot.lane.b32.xlu0 %v254, 24
        %v516 = vpop.permute.xlu0 %515
        %517 = vrot.lane.b32.xlu0 %v255, 24
        %v518 = vpop.permute.xlu0 %517
        %519 = vrot.lane.b32.xlu0 %v256, 24
        %v520 = vpop.permute.xlu0 %519
        %521 = vrot.lane.b32.xlu0 %v257, 24
        %v522 = vpop.permute.xlu0 %521
        %523 = vrot.lane.b32.xlu0 %v258, 24
        %v524 = vpop.permute.xlu0 %523
        %525 = vrot.lane.b32.xlu0 %v441, 24
        %v526 = vpop.permute.xlu0 %525
        %527 = vrot.lane.b32.xlu0 %v512, 24
        %v528 = vpop.permute.xlu0 %527
        %v530 = vunpack.c.l.b16 %v218
        %v531 = vpack.c.b16 %v530, %v530
        %v533 = vshrl.u32 %v512, 16
        %v535 = vshll.u32 %v512, 16
        %v537 = vrot.slane %v535, 1
        %v538 = vor.u32 %v533, %v537
        %v540 = vshll.u32 %v531, 16
        %v542 = vrot.slane %v540, 1
        %v543 = vsel %vm283, %v538, %v542
        %544 = vrot.lane.b32.xlu0 %v319, 28
        %v545 = vpop.permute.xlu0 %544
        %546 = vrot.lane.b32.xlu0 %v331, 28
        %v547 = vpop.permute.xlu0 %546
        %548 = vrot.lane.b32.xlu0 %v343, 28
        %v549 = vpop.permute.xlu0 %548
        %550 = vrot.lane.b32.xlu0 %v355, 28
        %v551 = vpop.permute.xlu0 %550
        %552 = vrot.lane.b32.xlu0 %v367, 28
        %v553 = vpop.permute.xlu0 %552
        %554 = vrot.lane.b32.xlu0 %v379, 28
        %v555 = vpop.permute.xlu0 %554
        %556 = vrot.lane.b32.xlu0 %v472, 28
        %v557 = vpop.permute.xlu0 %556
        %558 = vrot.lane.b32.xlu0 %v543, 28
        %v559 = vpop.permute.xlu0 %558
        %v560 = vrot.slane %v512, 1
        %v561 = vrot.slane %v531, 1
        %v562 = vsel %vm396, %v560, %v561
        %563 = vrot.lane.b32.xlu0 %v405, 32
        %v564 = vpop.permute.xlu0 %563
        %565 = vrot.lane.b32.xlu0 %v408, 32
        %v566 = vpop.permute.xlu0 %565
        %567 = vrot.lane.b32.xlu0 %v411, 32
        %v568 = vpop.permute.xlu0 %567
        %569 = vrot.lane.b32.xlu0 %v414, 32
        %v570 = vpop.permute.xlu0 %569
        %571 = vrot.lane.b32.xlu0 %v417, 32
        %v572 = vpop.permute.xlu0 %571
        %573 = vrot.lane.b32.xlu0 %v420, 32
        %v574 = vpop.permute.xlu0 %573
        %575 = vrot.lane.b32.xlu0 %v491, 32
        %v576 = vpop.permute.xlu0 %575
        %577 = vrot.lane.b32.xlu0 %v562, 32
        %v578 = vpop.permute.xlu0 %577
        %vm579 = vcmask 31744
        %v581 = vsel %vm579, %v251, %v381
        %v583 = vsel %vm579, %v252, %v383
        %v585 = vsel %vm579, %v253, %v385
        %v587 = vsel %vm579, %v254, %v387
        %v589 = vsel %vm579, %v255, %v389
        %v591 = vsel %vm579, %v256, %v391
        %v593 = vsel %vm579, %v257, %v393
        %v595 = vsel %vm579, %v258, %v395
        %vm596 = vcmask 64512
        %v598 = vsel %vm596, %v581, %v422
        %v600 = vsel %vm596, %v583, %v424
        %v602 = vsel %vm596, %v585, %v426
        %v604 = vsel %vm596, %v587, %v428
        %v606 = vsel %vm596, %v589, %v430
        %v608 = vsel %vm596, %v591, %v432
        %v610 = vsel %vm596, %v593, %v434
        %v612 = vsel %vm596, %v595, %v436
        %vm613 = vcmask 97280
        %v615 = vsel %vm613, %v598, %v443
        %v617 = vsel %vm613, %v600, %v445
        %v619 = vsel %vm613, %v602, %v447
        %v621 = vsel %vm613, %v604, %v449
        %v623 = vsel %vm613, %v606, %v451
        %v625 = vsel %vm613, %v608, %v453
        %v627 = vsel %vm613, %v610, %v455
        %v629 = vsel %vm613, %v612, %v457
        %vm630 = vcmask 130048
        %v632 = vsel %vm630, %v615, %v474
        %v634 = vsel %vm630, %v617, %v476
        %v636 = vsel %vm630, %v619, %v478
        %v638 = vsel %vm630, %v621, %v480
        %v640 = vsel %vm630, %v623, %v482
        %v642 = vsel %vm630, %v625, %v484
        %v644 = vsel %vm630, %v627, %v486
        %v646 = vsel %vm630, %v629, %v488
        %vm647 = vcmask 162816
        %v649 = vsel %vm647, %v632, %v493
        %v651 = vsel %vm647, %v634, %v495
        %v653 = vsel %vm647, %v636, %v497
        %v655 = vsel %vm647, %v638, %v499
        %v657 = vsel %vm647, %v640, %v501
        %v659 = vsel %vm647, %v642, %v503
        %v661 = vsel %vm647, %v644, %v505
        %v663 = vsel %vm647, %v646, %v507
        %vm664 = vcmask 195584
        %v666 = vsel %vm664, %v649, %v514
        %v668 = vsel %vm664, %v651, %v516
        %v670 = vsel %vm664, %v653, %v518
        %v672 = vsel %vm664, %v655, %v520
        %v674 = vsel %vm664, %v657, %v522
        %v676 = vsel %vm664, %v659, %v524
        %v678 = vsel %vm664, %v661, %v526
        %v680 = vsel %vm664, %v663, %v528
        %vm681 = vcmask 228352
        %v683 = vsel %vm681, %v666, %v545
        %v685 = vsel %vm681, %v668, %v547
        %v687 = vsel %vm681, %v670, %v549
        %v689 = vsel %vm681, %v672, %v551
        %v691 = vsel %vm681, %v674, %v553
        %v693 = vsel %vm681, %v676, %v555
        %v695 = vsel %vm681, %v678, %v557
        %v697 = vsel %vm681, %v680, %v559
        %vm698 = vcmask 261120
        %v700 = vsel %vm698, %v683, %v564
        %v702 = vsel %vm698, %v685, %v566
        %v704 = vsel %vm698, %v687, %v568
        %v706 = vsel %vm698, %v689, %v570
        %v708 = vsel %vm698, %v691, %v572
        %v710 = vsel %vm698, %v693, %v574
        %v712 = vsel %vm698, %v695, %v576
        %v714 = vsel %vm698, %v697, %v578
        %v715 = vld [vmem:[%s1] sm:$0xf]
        %v716 = vld [vmem:[%s1 + $0x4] sm:$0xf]
        %v717 = vld [vmem:[%s1 + $0x8] sm:$0xf]
        %v718 = vld [vmem:[%s1 + $0xc] sm:$0xf]
        %v719 = vld [vmem:[%s1 + $0x10] sm:$0x3]
        %v720 = vld [vmem:[%s2] sm:$0x1]
        %v722 = vlaneseq
        %v723 = vshrl.u32 %v722, 7
        %v724 = vsub.s32 0, %v723
        %v725 = vrot.slane %v720, %v724
        %v732 = vunpack.c.l.b16 %v715
        %v733 = vunpack.c.l.b16 %v716
        %v734 = vunpack.c.l.b16 %v717
        %v735 = vunpack.c.l.b16 %v718
        %v736 = vunpack.c.l.b16 %v719
        %v737 = vpack.c.b16 %v733, %v732
        %v738 = vpack.c.b16 %v735, %v734
        %v739 = vpack.c.b16 %v736, %v736
        %vm742 = vcmask 293888
        %v743 = vsel %vm742, %v700, 0
        %v745 = vsel %vm742, %v702, 0
        %v747 = vsel %vm742, %v704, 0
        %v749 = vsel %vm742, %v706, 0
        %v751 = vsel %vm742, %v708, 0
        %v753 = vsel %vm742, %v710, 0
        %v755 = vsel %vm742, %v712, 0
        %v757 = vsel %vm742, %v714, 0
        %vm759 = vcmask 1041408
        %v761 = vsel %vm759, %v739, 0
        %763 = vmatprep.subr.bf16.mxu0 0
        %764 = vmatpush1.bf16.msra.mxu0 0
        %765 = vmatprep.subr.bf16.mxu0 0
        %766 = vmatpush1.bf16.msra.mxu0 0
        %767 = vmatprep.subr.bf16.mxu0 0
        %768 = vmatpush1.bf16.msra.mxu0 0
        %769 = vmatprep.subr.bf16.mxu0 0
        %770 = vmatpush1.bf16.msra.mxu0 0
        %771 = vmatprep.subr.bf16.mxu0 0
        %772 = vmatpush1.bf16.msra.mxu0 0
        %773 = vmatprep.subr.bf16.mxu0 0
        %774 = vmatpush1.bf16.msra.mxu0 %v761
        %775 = vmatprep.subr.bf16.mxu0 0
        %776 = vmatpush1.bf16.msra.mxu0 %v738
        %777 = vmatprep.subr.bf16.mxu0 0
        %778 = vmatpush1.bf16.msra.mxu0 %v737
        %779 = vmatprep.subr.bf16.mxu0 0
        %780 = vmatpush2.bf16.msra.mxu0 0
        %781 = vmatprep.subr.bf16.mxu0 0
        %782 = vmatpush2.bf16.msra.mxu0 0
        %783 = vmatprep.subr.bf16.mxu0 0
        %784 = vmatpush2.bf16.msra.mxu0 0
        %785 = vmatprep.subr.bf16.mxu0 0
        %786 = vmatpush2.bf16.msra.mxu0 0
        %787 = vmatprep.subr.bf16.mxu0 0
        %788 = vmatpush2.bf16.msra.mxu0 0
        %789 = vmatprep.subr.bf16.mxu0 0
        %790 = vmatpush2.bf16.msra.mxu0 0
        %791 = vmatprep.subr.bf16.mxu0 0
        %792 = vmatpush2.bf16.msra.mxu0 0
        %793 = vmatprep.subr.bf16.mxu0 0
        %794 = vmatpush2.bf16.msra.mxu0 0
        %795 = vmatprep.mubr.bf16.mxu0 0
        %796 = vmatmul.mubr.bf16.gmra.mxu0 %v743
        %v797 = vpop.f32.mrf.mxu0
        %v798 = vadd.f32 %v725, %v797
        %v799 = vpop.f32.mrf.mxu0
        %v800 = vpop.f32.mrf.mxu0
        %v801 = vadd.f32 %v725, %v800
        %v802 = vpop.f32.mrf.mxu0
        %803 = vmatprep.mubr.bf16.mxu0 0
        %804 = vmatmul.mubr.bf16.gmra.mxu0 %v745
        %v805 = vpop.f32.mrf.mxu0
        %v806 = vadd.f32 %v725, %v805
        %v807 = vpop.f32.mrf.mxu0
        %v808 = vpop.f32.mrf.mxu0
        %v809 = vadd.f32 %v725, %v808
        %v810 = vpop.f32.mrf.mxu0
        %811 = vmatprep.mubr.bf16.mxu0 0
        %812 = vmatmul.mubr.bf16.gmra.mxu0 %v747
        %v813 = vpop.f32.mrf.mxu0
        %v814 = vadd.f32 %v725, %v813
        %v815 = vpop.f32.mrf.mxu0
        %v816 = vpop.f32.mrf.mxu0
        %v817 = vadd.f32 %v725, %v816
        %v818 = vpop.f32.mrf.mxu0
        %819 = vmatprep.mubr.bf16.mxu0 0
        %820 = vmatmul.mubr.bf16.gmra.mxu0 %v749
        %v821 = vpop.f32.mrf.mxu0
        %v822 = vadd.f32 %v725, %v821
        %v823 = vpop.f32.mrf.mxu0
        %v824 = vpop.f32.mrf.mxu0
        %v825 = vadd.f32 %v725, %v824
        %v826 = vpop.f32.mrf.mxu0
        %827 = vmatprep.mubr.bf16.mxu0 0
        %828 = vmatmul.mubr.bf16.gmra.mxu0 %v751
        %v829 = vpop.f32.mrf.mxu0
        %v830 = vadd.f32 %v725, %v829
        %v831 = vpop.f32.mrf.mxu0
        %v832 = vpop.f32.mrf.mxu0
        %v833 = vadd.f32 %v725, %v832
        %v834 = vpop.f32.mrf.mxu0
        %835 = vmatprep.mubr.bf16.mxu0 0
        %836 = vmatmul.mubr.bf16.gmra.mxu0 %v753
        %v837 = vpop.f32.mrf.mxu0
        %v838 = vadd.f32 %v725, %v837
        %v839 = vpop.f32.mrf.mxu0
        %v840 = vpop.f32.mrf.mxu0
        %v841 = vadd.f32 %v725, %v840
        %v842 = vpop.f32.mrf.mxu0
        %843 = vmatprep.mubr.bf16.mxu0 0
        %844 = vmatmul.mubr.bf16.gmra.mxu0 %v755
        %v845 = vpop.f32.mrf.mxu0
        %v846 = vadd.f32 %v725, %v845
        %v847 = vpop.f32.mrf.mxu0
        %v848 = vpop.f32.mrf.mxu0
        %v849 = vadd.f32 %v725, %v848
        %v850 = vpop.f32.mrf.mxu0
        %851 = vmatprep.mubr.bf16.mxu0 0
        %852 = vmatmul.mubr.bf16.gmra.mxu0 %v757
        %v853 = vpop.f32.mrf.mxu0
        %v854 = vadd.f32 %v725, %v853
        %v855 = vpop.f32.mrf.mxu0
        %v856 = vpop.f32.mrf.mxu0
        %v857 = vadd.f32 %v725, %v856
        %v858 = vpop.f32.mrf.mxu0
        %859 = vdwg.mxu0
        %v860 = vmax.f32 %v798, 0.0
        %v861 = vmax.f32 %v801, 0.0
        %v862 = vmax.f32 %v806, 0.0
        %v863 = vmax.f32 %v809, 0.0
        %v864 = vmax.f32 %v814, 0.0
        %v865 = vmax.f32 %v817, 0.0
        %v866 = vmax.f32 %v822, 0.0
        %v867 = vmax.f32 %v825, 0.0
        %v868 = vmax.f32 %v830, 0.0
        %v869 = vmax.f32 %v833, 0.0
        %v870 = vmax.f32 %v838, 0.0
        %v871 = vmax.f32 %v841, 0.0
        %v872 = vmax.f32 %v846, 0.0
        %v873 = vmax.f32 %v849, 0.0
        %v874 = vmax.f32 %v854, 0.0
        %v875 = vmax.f32 %v857, 0.0
        %v876 = vmin.f32 %v860, 6.0
        %v877 = vmin.f32 %v861, 6.0
        %v878 = vmin.f32 %v862, 6.0
        %v879 = vmin.f32 %v863, 6.0
        %v880 = vmin.f32 %v864, 6.0
        %v881 = vmin.f32 %v865, 6.0
        %v882 = vmin.f32 %v866, 6.0
        %v883 = vmin.f32 %v867, 6.0
        %v884 = vmin.f32 %v868, 6.0
        %v885 = vmin.f32 %v869, 6.0
        %v886 = vmin.f32 %v870, 6.0
        %v887 = vmin.f32 %v871, 6.0
        %v888 = vmin.f32 %v872, 6.0
        %v889 = vmin.f32 %v873, 6.0
        %v890 = vmin.f32 %v874, 6.0
        %v891 = vmin.f32 %v875, 6.0
        %892 = vst [vmem:[%s177] sm:$0xff] %v876
        %893 = vst [vmem:[%s177 + $0x8] sm:$0xff] %v877
        %894 = vst [vmem:[%s177 + $0x10] sm:$0xff] %v878
        %895 = vst [vmem:[%s177 + $0x18] sm:$0xff] %v879
        %896 = vst [vmem:[%s177 + $0x20] sm:$0xff] %v880
        %897 = vst [vmem:[%s177 + $0x28] sm:$0xff] %v881
        %898 = vst [vmem:[%s177 + $0x30] sm:$0xff] %v882
        %899 = vst [vmem:[%s177 + $0x38] sm:$0xff] %v883
        %900 = vst [vmem:[%s177 + $0x40] sm:$0xff] %v884
        %901 = vst [vmem:[%s177 + $0x48] sm:$0xff] %v885
        %902 = vst [vmem:[%s177 + $0x50] sm:$0xff] %v886
        %903 = vst [vmem:[%s177 + $0x58] sm:$0xff] %v887
        %904 = vst [vmem:[%s177 + $0x60] sm:$0xff] %v888
        %905 = vst [vmem:[%s177 + $0x68] sm:$0xff] %v889
        %906 = vst [vmem:[%s177 + $0x70] sm:$0xff] %v890
        %907 = vst [vmem:[%s177 + $0x78] sm:$0xff] %v891
        %s908 = sand.u32 %s107, 1
        %s909 = scalar_lea.sflag [#allocation3], %s908
        %s910 = sand.u32 %s107, 1
        %s911 = smul.addr %s910, 128
        %s912 = scalar_lea.vmem [#allocation2], %s911
        // Predicated region
        $region33: #{tpu_custom_call.1} parent=31 // pred_check
          %p913 = pneg %p117
        $region34: #{tpu_custom_call.1} parent=31 // pred_check_branch
          %915 = sbr.rel (%p913) target = $region36
        $region35: #{tpu_custom_call.1} parent=31 // pred_region
          %s916 = smul.u32 8, %s22
          %s918 = ssub.s32 2048, 2048
          %919 = vsyncadd %s909, %s918
          %s920 = smul.addr %s916, 2
          %s921 = smul.addr %s21, 32
          %s922 = sadd.s32 %s920, %s921
          %s923 = smul.addr %s922, 128
          %s924 = scalar_lea.hbm %s3, %s923
          %s925 = sshll.u32 %s912, 4
          %s926 = int_to_ptr.vmem [resolvable:$true] %s925
          %931 = dma.vmem_to_hbm [thread:$0]  %s926, 2048, %s924, %s909, 128, 128, 8
        $region36: #{tpu_custom_call.1} parent=31 // pred_fallthru
          _
      $region32: #{tpu_custom_call.1} parent=5 // pred_fallthru
        _
      %p932 = scmp.le.s32.totalorder 2, %s12
      // Predicated region
      $region37: #{tpu_custom_call.1} parent=5 // pred_check
        %p933 = pneg %p932
      $region38: #{tpu_custom_call.1} parent=5 // pred_check_branch
        %935 = sbr.rel (%p933) target = $region40
      $region39: #{tpu_custom_call.1} parent=5 // pred_region
        %s936 = ssub.s32 %s12, 2
        // Predicated region
        $region41: #{tpu_custom_call.1} parent=39 // pred_check
          %p937 = pneg %p123
        $region42: #{tpu_custom_call.1} parent=39 // pred_check_branch
          %939 = sbr.rel (%p937) target = $region44
        $region43: #{tpu_custom_call.1} parent=39 // pred_region
          %s940 = sand.u32 %s108, 1
          %s941 = scalar_lea.sflag [#allocation3], %s940
          %s942 = sand.u32 %s108, 1
          %s943 = smul.addr %s942, 128
          %s944 = scalar_lea.vmem [#allocation2], %s943
          %945 = dma.done %s941, 2048
        $region44: #{tpu_custom_call.1} parent=39 // pred_fallthru
          _
      $region40: #{tpu_custom_call.1} parent=5 // pred_fallthru
        _
    $region6: #{tpu_custom_call.1} parent=1 // loop_footer
      %s16 = sadd.s32 1, %s12
    $region7: #{tpu_custom_call.1} parent=1 // loop_footer_branch
      %11 = sbr.rel target = $region3
    $region8: #{tpu_custom_call.1} parent=1 // loop_exit
      _
    %946 = vsyncpa [#allocation3], 1
    %s947 = scalar_lea.sflag [#allocation3], 1
    %948 = vsyncpa %s947, 1

</llo_original>
